<compile_context>
chip_gen: v6e
topology: v6e:2x2x1
jax: 0.10.0
libtpu: 0.0.40
codegen_flags: <defaults>
</compile_context>

<pallas_src>
import jax
import jax.numpy as jnp
import numpy as np
from jax.experimental import pallas as pl
from jax.experimental.pallas import tpu as pltpu


# ----------------------------- Pallas kernel --------------------------------
def decoder_kernel(emb_ref, hid_ref, cell_ref, enc_ref, mask_ref,
                   wah_ref, wae_ref, ba_ref, vrow_ref,
                   wlstm_ref, blstm_ref,
                   wfc_ref, bfc_ref,
                   pred_ref, hout_ref, cout_ref, attn_ref):
    B, Dh = hout_ref.shape
    S = attn_ref.shape[1]
    H2 = enc_ref.shape[2]

    emb = emb_ref[...]                       # [B, E]      bf16
    hid_f = hid_ref[...]                     # [B, Dh]     f32
    hid = hid_f.astype(jnp.bfloat16)         # matmul operand
    cel = cell_ref[...]                      # [B, Dh]     f32
    enc = enc_ref[...]                       # [B, S, 2H]  f32
    mask = mask_ref[...]                     # [B, S]      f32

    # ---------------- attention -------------------------------------------
    # energy = tanh([hidden ; enc] @ Wa^T + ba), hidden part broadcast over S.
    e_h = jnp.dot(hid, wah_ref[...], preferred_element_type=jnp.float32) + ba_ref[...]  # [B, Dh]
    enc2 = enc.reshape(B * S, H2)            # leading-dim collapse (tile-compatible)
    energy = jnp.tanh(
        jnp.dot(enc2.astype(jnp.bfloat16), wae_ref[...],
                preferred_element_type=jnp.float32).reshape(B, S, Dh)
        + e_h[:, None, :])                                                              # [B, S, Dh]

    # score = energy @ v  as a lane reduction -> lane-contiguous [B, S]
    score = jnp.sum(energy * vrow_ref[...][None], axis=-1)                              # [B, S]

    # masked softmax over source positions (lane axis); divide on the EUP
    score = jnp.where(mask == 0.0, -1.0e10, score)
    score = score - jnp.max(score, axis=-1, keepdims=True)
    p = jnp.exp(score)
    a = p * pl.reciprocal(jnp.sum(p, axis=-1, keepdims=True), approx=True)              # [B, S]
    attn_ref[...] = a

    # weighted context in f32: VPU multiply + sublane reduce (no MXU, no a->bf16 cast)
    weighted = jnp.sum(a[:, :, None] * enc, axis=1)                                     # [B, 2H] f32

    # ---------------- single-step LSTM (one fused dot, gate order i,f,g,o) --
    x_we = jnp.concatenate([weighted.astype(jnp.bfloat16), emb], axis=1)                # [B, 2H+E]
    xh = jnp.concatenate([x_we, hid], axis=1)                                           # [B, 2H+E+Dh]
    gates = (jnp.dot(xh, wlstm_ref[...], preferred_element_type=jnp.float32)
             + blstm_ref[...])                                                          # [B, 4Dh] f32
    i = jax.nn.sigmoid(gates[:, 0 * Dh:1 * Dh])
    f = jax.nn.sigmoid(gates[:, 1 * Dh:2 * Dh])
    g = jnp.tanh(gates[:, 2 * Dh:3 * Dh])
    o = jax.nn.sigmoid(gates[:, 3 * Dh:4 * Dh])
    c_new = f * cel + i * g
    h_new = o * jnp.tanh(c_new)

    # ---------------- output projection: fc(cat(output, weighted, embedded)) -
    hx = jnp.concatenate([h_new.astype(jnp.bfloat16), x_we], axis=1)                    # [B, Dh+2H+E]
    pred = (jnp.dot(hx, wfc_ref[...], preferred_element_type=jnp.float32)
            + bfc_ref[...])                                                             # [B, Vp]

    pred_ref[...] = pred
    hout_ref[...] = h_new
    cout_ref[...] = c_new


# ----------------------------- one-time weight prep --------------------------
def prepare_params(params):
    """Hoist all weight transposes / casts / padding out of the per-step path."""
    wdt = jnp.bfloat16
    Dh = params["attn_w"].shape[0]
    V, Kfc = params["fc_w"].shape
    Vp = pl.cdiv(V, 128) * 128               # pad fc output dim -> unmasked lane-dense store

    wa = params["attn_w"]                    # [Dh, Dh+2H], attention cat order (hidden, enc)
    wfc_pad = jnp.zeros((Vp, Kfc), jnp.float32).at[:V].set(params["fc_w"])
    prepared = {
        "emb":      params["emb"].astype(wdt),                               # [V, E]
        "wa_h_t":   jnp.transpose(wa[:, :Dh]).astype(wdt),                   # [Dh, Dh]
        "wa_e_t":   jnp.transpose(wa[:, Dh:]).astype(wdt),                   # [2H, Dh]
        "ba":       params["attn_b"][None, :].astype(jnp.float32),           # [1, Dh]
        "v_row":    params["v_w"].astype(jnp.float32),                       # [1, Dh]
        # stacked LSTM weight: gates = cat(weighted, emb, hidden) @ [w_ih ; w_hh]^T
        "w_lstm_t": jnp.transpose(jnp.concatenate(
                        [params["w_ih"], params["w_hh"]], axis=1)).astype(wdt),  # [2H+E+Dh, 4Dh]
        "b_lstm":   (params["b_ih"] + params["b_hh"])[None, :].astype(jnp.float32),
        # unsplit padded fc weight; pred_input order = (h_new, weighted, embedded)
        "wfc_t":    jnp.transpose(wfc_pad).astype(wdt),                      # [Dh+2H+E, Vp]
        "b_fc":     jnp.zeros((1, Vp), jnp.float32).at[0, :V].set(params["fc_b"]),
        "V": V, "Vp": Vp,
    }
    return prepared


# ----------------------------- per-step wrapper -------------------------------
def decoder_forward(prepared, input_ids, hidden, cell, encoder_outputs, mask):
    """Mirrors Decoder.forward.
    input_ids: [B] int32, hidden/cell: [B, Dh], encoder_outputs: [S, B, 2H], mask: [B, S]."""
    S, B, H2 = encoder_outputs.shape
    Dh = hidden.shape[1]
    V, Vp = prepared["V"], prepared["Vp"]

    # embedding + dropout(eval -> identity); leading seq dim of 1 is squeezed
    embedded = prepared["emb"][input_ids]                                    # [B, E] bf16
    enc_bsh = jnp.transpose(encoder_outputs, (1, 0, 2)).astype(jnp.float32)  # [B, S, 2H]
    mask_f = mask.astype(jnp.float32)

    vmem = pl.BlockSpec(memory_space=pltpu.MemorySpace.VMEM)
    out_shape = (
        jax.ShapeDtypeStruct((B, Vp), jnp.float32),   # prediction (padded)
        jax.ShapeDtypeStruct((B, Dh), jnp.float32),   # hidden
        jax.ShapeDtypeStruct((B, Dh), jnp.float32),   # cell
        jax.ShapeDtypeStruct((B, S), jnp.float32),    # attention
    )
    pred_p, h_new, c_new, attn = pl.pallas_call(
        decoder_kernel,
        out_shape=out_shape,
        in_specs=[vmem] * 13,
        out_specs=(vmem, vmem, vmem, vmem),
    )(embedded, hidden.astype(jnp.float32), cell.astype(jnp.float32), enc_bsh, mask_f,
      prepared["wa_h_t"], prepared["wa_e_t"], prepared["ba"], prepared["v_row"],
      prepared["w_lstm_t"], prepared["b_lstm"],
      prepared["wfc_t"], prepared["b_fc"])

    return pred_p[:, :V], h_new, c_new, attn


# ----------------------------- pure-JAX reference ----------------------------
def decoder_reference(params, input_ids, hidden, cell, encoder_outputs, mask):
    S, B, H2 = encoder_outputs.shape
    Dh = hidden.shape[1]
    embedded = params["emb"][input_ids].astype(jnp.float32)                 # [B, E]
    enc_bf = jnp.transpose(encoder_outputs, (1, 0, 2))                      # [B, S, 2H]

    hid_rep = jnp.broadcast_to(hidden[:, None, :], (B, S, Dh))
    cat = jnp.concatenate([hid_rep, enc_bf], axis=2)                        # [B, S, Dh+2H]
    energy = jnp.tanh(jnp.einsum("bsk,dk->bsd", cat, params["attn_w"]) + params["attn_b"])
    score = jnp.einsum("bsd,d->bs", energy, params["v_w"][0])               # [B, S]
    score = jnp.where(mask == 0.0, -1.0e10, score)
    a = jax.nn.softmax(score, axis=1)                                       # [B, S]
    weighted = jnp.einsum("bs,bsh->bh", a, enc_bf)                          # [B, 2H]

    x = jnp.concatenate([weighted, embedded], axis=1)
    gates = (x @ params["w_ih"].T + hidden @ params["w_hh"].T
             + params["b_ih"] + params["b_hh"])
    i = jax.nn.sigmoid(gates[:, 0 * Dh:1 * Dh])
    f = jax.nn.sigmoid(gates[:, 1 * Dh:2 * Dh])
    g = jnp.tanh(gates[:, 2 * Dh:3 * Dh])
    o = jax.nn.sigmoid(gates[:, 3 * Dh:4 * Dh])
    c_new = f * cell + i * g
    h_new = o * jnp.tanh(c_new)

    pred_in = jnp.concatenate([h_new, weighted, embedded], axis=1)
    pred = pred_in @ params["fc_w"].T + params["fc_b"]
    return pred, h_new, c_new, a


# ----------------------------- main -------------------------------------------
if __name__ == "__main__":
    # hparams
    B, S = 2, 8
    ENC_HID = 32          # enc_hid_dim (bidirectional -> 2H = 64)
    DEC_HID = 32          # dec_hid_dim
    EMB = 16              # dec_emb_dim
    VOCAB = 40            # output_dim = len(target_field.vocab.itos)
    H2 = 2 * ENC_HID

    key = jax.random.PRNGKey(0)
    ks = jax.random.split(key, 16)

    def rand(k, shape, scale=0.1):
        return (scale * jax.random.normal(k, shape)).astype(jnp.float32)

    params = {
        "emb":    rand(ks[0], (VOCAB, EMB), 0.5),
        "attn_w": rand(ks[1], (DEC_HID, DEC_HID + H2)),
        "attn_b": rand(ks[2], (DEC_HID,)),
        "v_w":    rand(ks[3], (1, DEC_HID)),
        "w_ih":   rand(ks[4], (4 * DEC_HID, H2 + EMB)),
        "w_hh":   rand(ks[5], (4 * DEC_HID, DEC_HID)),
        "b_ih":   rand(ks[6], (4 * DEC_HID,)),
        "b_hh":   rand(ks[7], (4 * DEC_HID,)),
        "fc_w":   rand(ks[8], (VOCAB, DEC_HID + H2 + EMB)),
        "fc_b":   rand(ks[9], (VOCAB,)),
    }

    input_ids = jnp.array([3, 7], dtype=jnp.int32)                          # [B]
    hidden = rand(ks[10], (B, DEC_HID), 0.5)
    cell = rand(ks[11], (B, DEC_HID), 0.5)
    encoder_outputs = rand(ks[12], (S, B, H2), 0.5)                         # [S, B, 2H]
    mask = jnp.ones((B, S), dtype=jnp.float32).at[1, S - 3:].set(0.0)       # pad out last 3 of batch 1

    prepared = prepare_params(params)                                       # one-time weight prep
    pred, h_new, c_new, attn = decoder_forward(prepared, input_ids, hidden, cell,
                                               encoder_outputs, mask)
    jax.block_until_ready((pred, h_new, c_new, attn))

    # sanity vs pure-JAX reference (bf16 matmul operands -> loose-ish tolerances)
    rp, rh, rc, ra = decoder_reference(params, input_ids, hidden, cell,
                                       encoder_outputs, mask)
    np.testing.assert_allclose(np.asarray(attn), np.asarray(ra), atol=1e-2, rtol=1e-2)
    np.testing.assert_allclose(np.asarray(h_new), np.asarray(rh), atol=1e-2, rtol=1e-2)
    np.testing.assert_allclose(np.asarray(c_new), np.asarray(rc), atol=1e-2, rtol=1e-2)
    np.testing.assert_allclose(np.asarray(pred), np.asarray(rp), atol=1e-2, rtol=1e-2)
    np.testing.assert_allclose(np.asarray(attn).sum(axis=1), np.ones(B), atol=2e-3)
    assert pred.shape == (B, VOCAB) and attn.shape == (B, S)

    print("KERNEL_OK")
</pallas_src>

<mosaic_0001>
module attributes {stable_mosaic.version = 11 : i64} {
  func.func @decoder_kernel(%arg0: memref<2x16xbf16, #tpu.memory_space<vmem>>, %arg1: memref<2x32xf32, #tpu.memory_space<vmem>>, %arg2: memref<2x32xf32, #tpu.memory_space<vmem>>, %arg3: memref<2x8x64xf32, #tpu.memory_space<vmem>>, %arg4: memref<2x8xf32, #tpu.memory_space<vmem>>, %arg5: memref<32x32xbf16, #tpu.memory_space<vmem>>, %arg6: memref<64x32xbf16, #tpu.memory_space<vmem>>, %arg7: memref<1x32xf32, #tpu.memory_space<vmem>>, %arg8: memref<1x32xf32, #tpu.memory_space<vmem>>, %arg9: memref<112x128xbf16, #tpu.memory_space<vmem>>, %arg10: memref<1x128xf32, #tpu.memory_space<vmem>>, %arg11: memref<112x128xbf16, #tpu.memory_space<vmem>>, %arg12: memref<1x128xf32, #tpu.memory_space<vmem>>, %arg13: memref<2x128xf32, #tpu.memory_space<vmem>>, %arg14: memref<2x32xf32, #tpu.memory_space<vmem>>, %arg15: memref<2x32xf32, #tpu.memory_space<vmem>>, %arg16: memref<2x8xf32, #tpu.memory_space<vmem>>) attributes {dimension_semantics = [], scalar_prefetch = 0 : i64, scratch_operands = 0 : i64, tpu.core_type = #tpu.core_type<tc>} {
    %c0 = arith.constant 0 : index
    %c0_0 = arith.constant 0 : index
    %0 = vector.load %arg0[%c0, %c0_0] : memref<2x16xbf16, #tpu.memory_space<vmem>>, vector<2x16xbf16>
    %c0_1 = arith.constant 0 : index
    %c0_2 = arith.constant 0 : index
    %1 = vector.load %arg1[%c0_1, %c0_2] : memref<2x32xf32, #tpu.memory_space<vmem>>, vector<2x32xf32>
    %2 = arith.truncf %1 : vector<2x32xf32> to vector<2x32xbf16>
    %c0_3 = arith.constant 0 : index
    %c0_4 = arith.constant 0 : index
    %3 = vector.load %arg2[%c0_3, %c0_4] : memref<2x32xf32, #tpu.memory_space<vmem>>, vector<2x32xf32>
    %c0_5 = arith.constant 0 : index
    %c0_6 = arith.constant 0 : index
    %c0_7 = arith.constant 0 : index
    %4 = vector.load %arg3[%c0_5, %c0_6, %c0_7] : memref<2x8x64xf32, #tpu.memory_space<vmem>>, vector<2x8x64xf32>
    %c0_8 = arith.constant 0 : index
    %c0_9 = arith.constant 0 : index
    %5 = vector.load %arg4[%c0_8, %c0_9] : memref<2x8xf32, #tpu.memory_space<vmem>>, vector<2x8xf32>
    %c0_10 = arith.constant 0 : index
    %c0_11 = arith.constant 0 : index
    %6 = vector.load %arg5[%c0_10, %c0_11] : memref<32x32xbf16, #tpu.memory_space<vmem>>, vector<32x32xbf16>
    %cst = arith.constant dense<0.000000e+00> : vector<2x32xf32>
    %7 = tpu.matmul %2, %6, %cst {dimension_numbers = #tpu.dot_dimension_numbers<[1], [0], [0], [1], [0, 0, 1, 1], [], []>} : vector<2x32xbf16>, vector<32x32xbf16>, vector<2x32xf32> -> vector<2x32xf32>
    %c0_12 = arith.constant 0 : index
    %c0_13 = arith.constant 0 : index
    %8 = vector.load %arg7[%c0_12, %c0_13] : memref<1x32xf32, #tpu.memory_space<vmem>>, vector<1x32xf32>
    %9 = vector.broadcast %8 : vector<1x32xf32> to vector<2x32xf32>
    %10 = arith.addf %7, %9 : vector<2x32xf32>
    %11 = vector.shape_cast %4 : vector<2x8x64xf32> to vector<16x64xf32>
    %12 = arith.truncf %11 : vector<16x64xf32> to vector<16x64xbf16>
    %c0_14 = arith.constant 0 : index
    %c0_15 = arith.constant 0 : index
    %13 = vector.load %arg6[%c0_14, %c0_15] : memref<64x32xbf16, #tpu.memory_space<vmem>>, vector<64x32xbf16>
    %cst_16 = arith.constant dense<0.000000e+00> : vector<16x32xf32>
    %14 = tpu.matmul %12, %13, %cst_16 {dimension_numbers = #tpu.dot_dimension_numbers<[1], [0], [0], [1], [0, 0, 1, 1], [], []>} : vector<16x64xbf16>, vector<64x32xbf16>, vector<16x32xf32> -> vector<16x32xf32>
    %15 = vector.shape_cast %14 : vector<16x32xf32> to vector<2x8x32xf32>
    %16 = vector.shape_cast %10 : vector<2x32xf32> to vector<2x1x32xf32>
    %17 = vector.broadcast %16 : vector<2x1x32xf32> to vector<2x8x32xf32>
    %18 = arith.addf %15, %17 : vector<2x8x32xf32>
    %19 = math.tanh %18 : vector<2x8x32xf32>
    %c0_17 = arith.constant 0 : index
    %c0_18 = arith.constant 0 : index
    %20 = vector.load %arg8[%c0_17, %c0_18] : memref<1x32xf32, #tpu.memory_space<vmem>>, vector<1x32xf32>
    %21 = vector.shape_cast %20 : vector<1x32xf32> to vector<1x1x32xf32>
    %22 = vector.broadcast %21 : vector<1x1x32xf32> to vector<2x8x32xf32>
    %23 = arith.mulf %19, %22 : vector<2x8x32xf32>
    %cst_19 = arith.constant dense<0.000000e+00> : vector<2x8xf32>
    %24 = vector.multi_reduction <add>, %23, %cst_19 [2] : vector<2x8x32xf32> to vector<2x8xf32>
    %cst_20 = arith.constant 0.000000e+00 : f32
    %25 = vector.broadcast %cst_20 : f32 to vector<2x8xf32>
    %26 = arith.cmpf oeq, %5, %25 : vector<2x8xf32>
    %cst_21 = arith.constant -1.000000e+10 : f32
    %27 = vector.broadcast %cst_21 : f32 to vector<2x8xf32>
    %28 = arith.select %26, %27, %24 : vector<2x8xi1>, vector<2x8xf32>
    %cst_22 = arith.constant dense<0xFF800000> : vector<2xf32>
    %29 = vector.multi_reduction <maximumf>, %28, %cst_22 [1] : vector<2x8xf32> to vector<2xf32>
    %30 = vector.shape_cast %29 : vector<2xf32> to vector<2x1xf32>
    %31 = vector.broadcast %30 : vector<2x1xf32> to vector<2x8xf32>
    %32 = arith.subf %28, %31 : vector<2x8xf32>
    %33 = math.exp %32 : vector<2x8xf32>
    %cst_23 = arith.constant dense<0.000000e+00> : vector<2xf32>
    %34 = vector.multi_reduction <add>, %33, %cst_23 [1] : vector<2x8xf32> to vector<2xf32>
    %35 = vector.shape_cast %34 : vector<2xf32> to vector<2x1xf32>
    %36 = tpu.reciprocal %35 {approx = true} : vector<2x1xf32> -> vector<2x1xf32>
    %37 = vector.broadcast %36 : vector<2x1xf32> to vector<2x8xf32>
    %38 = arith.mulf %33, %37 : vector<2x8xf32>
    %c0_24 = arith.constant 0 : index
    %c0_25 = arith.constant 0 : index
    %39 = vector.load %arg16[%c0_24, %c0_25] : memref<2x8xf32, #tpu.memory_space<vmem>>, vector<2x8xf32>
    tpu.vector_store %arg16[%c0_24, %c0_25], %38 {strides = array<i32>} : memref<2x8xf32, #tpu.memory_space<vmem>>, vector<2x8xf32>,
    %40 = vector.shape_cast %38 : vector<2x8xf32> to vector<2x8x1xf32>
    %41 = vector.broadcast %40 : vector<2x8x1xf32> to vector<2x8x64xf32>
    %42 = arith.mulf %41, %4 : vector<2x8x64xf32>
    %cst_26 = arith.constant dense<0.000000e+00> : vector<2x64xf32>
    %43 = vector.multi_reduction <add>, %42, %cst_26 [1] : vector<2x8x64xf32> to vector<2x64xf32>
    %44 = arith.truncf %43 : vector<2x64xf32> to vector<2x64xbf16>
    %45 = tpu.concatenate %44, %0 in 1 : vector<2x64xbf16>, vector<2x16xbf16> -> vector<2x80xbf16>
    %46 = tpu.concatenate %45, %2 in 1 : vector<2x80xbf16>, vector<2x32xbf16> -> vector<2x112xbf16>
    %c0_27 = arith.constant 0 : index
    %c0_28 = arith.constant 0 : index
    %47 = vector.load %arg9[%c0_27, %c0_28] : memref<112x128xbf16, #tpu.memory_space<vmem>>, vector<112x128xbf16>
    %cst_29 = arith.constant dense<0.000000e+00> : vector<2x128xf32>
    %48 = tpu.matmul %46, %47, %cst_29 {dimension_numbers = #tpu.dot_dimension_numbers<[1], [0], [0], [1], [0, 0, 1, 1], [], []>} : vector<2x112xbf16>, vector<112x128xbf16>, vector<2x128xf32> -> vector<2x128xf32>
    %c0_30 = arith.constant 0 : index
    %c0_31 = arith.constant 0 : index
    %49 = vector.load %arg10[%c0_30, %c0_31] : memref<1x128xf32, #tpu.memory_space<vmem>>, vector<1x128xf32>
    %50 = vector.broadcast %49 : vector<1x128xf32> to vector<2x128xf32>
    %51 = arith.addf %48, %50 : vector<2x128xf32>
    %52 = vector.extract_strided_slice %51 {offsets = [0, 0], sizes = [2, 32], strides = [1, 1]} : vector<2x128xf32> to vector<2x32xf32>
    %53 = arith.negf %52 : vector<2x32xf32>
    %54 = math.exp %53 : vector<2x32xf32>
    %cst_32 = arith.constant 1.000000e+00 : f32
    %55 = vector.broadcast %cst_32 : f32 to vector<2x32xf32>
    %56 = arith.addf %55, %54 : vector<2x32xf32>
    %57 = arith.divf %55, %56 : vector<2x32xf32>
    %58 = vector.extract_strided_slice %51 {offsets = [0, 32], sizes = [2, 32], strides = [1, 1]} : vector<2x128xf32> to vector<2x32xf32>
    %59 = arith.negf %58 : vector<2x32xf32>
    %60 = math.exp %59 : vector<2x32xf32>
    %cst_33 = arith.constant 1.000000e+00 : f32
    %61 = vector.broadcast %cst_33 : f32 to vector<2x32xf32>
    %62 = arith.addf %61, %60 : vector<2x32xf32>
    %63 = arith.divf %61, %62 : vector<2x32xf32>
    %64 = vector.extract_strided_slice %51 {offsets = [0, 64], sizes = [2, 32], strides = [1, 1]} : vector<2x128xf32> to vector<2x32xf32>
    %65 = math.tanh %64 : vector<2x32xf32>
    %66 = vector.extract_strided_slice %51 {offsets = [0, 96], sizes = [2, 32], strides = [1, 1]} : vector<2x128xf32> to vector<2x32xf32>
    %67 = arith.negf %66 : vector<2x32xf32>
    %68 = math.exp %67 : vector<2x32xf32>
    %cst_34 = arith.constant 1.000000e+00 : f32
    %69 = vector.broadcast %cst_34 : f32 to vector<2x32xf32>
    %70 = arith.addf %69, %68 : vector<2x32xf32>
    %71 = arith.divf %69, %70 : vector<2x32xf32>
    %72 = arith.mulf %63, %3 : vector<2x32xf32>
    %73 = arith.mulf %57, %65 : vector<2x32xf32>
    %74 = arith.addf %72, %73 : vector<2x32xf32>
    %75 = math.tanh %74 : vector<2x32xf32>
    %76 = arith.mulf %71, %75 : vector<2x32xf32>
    %77 = arith.truncf %76 : vector<2x32xf32> to vector<2x32xbf16>
    %78 = tpu.concatenate %77, %45 in 1 : vector<2x32xbf16>, vector<2x80xbf16> -> vector<2x112xbf16>
    %c0_35 = arith.constant 0 : index
    %c0_36 = arith.constant 0 : index
    %79 = vector.load %arg11[%c0_35, %c0_36] : memref<112x128xbf16, #tpu.memory_space<vmem>>, vector<112x128xbf16>
    %cst_37 = arith.constant dense<0.000000e+00> : vector<2x128xf32>
    %80 = tpu.matmul %78, %79, %cst_37 {dimension_numbers = #tpu.dot_dimension_numbers<[1], [0], [0], [1], [0, 0, 1, 1], [], []>} : vector<2x112xbf16>, vector<112x128xbf16>, vector<2x128xf32> -> vector<2x128xf32>
    %c0_38 = arith.constant 0 : index
    %c0_39 = arith.constant 0 : index
    %81 = vector.load %arg12[%c0_38, %c0_39] : memref<1x128xf32, #tpu.memory_space<vmem>>, vector<1x128xf32>
    %82 = vector.broadcast %81 : vector<1x128xf32> to vector<2x128xf32>
    %83 = arith.addf %80, %82 : vector<2x128xf32>
    %c0_40 = arith.constant 0 : index
    %c0_41 = arith.constant 0 : index
    %84 = vector.load %arg13[%c0_40, %c0_41] : memref<2x128xf32, #tpu.memory_space<vmem>>, vector<2x128xf32>
    tpu.vector_store %arg13[%c0_40, %c0_41], %83 {strides = array<i32>} : memref<2x128xf32, #tpu.memory_space<vmem>>, vector<2x128xf32>,
    %c0_42 = arith.constant 0 : index
    %c0_43 = arith.constant 0 : index
    %85 = vector.load %arg14[%c0_42, %c0_43] : memref<2x32xf32, #tpu.memory_space<vmem>>, vector<2x32xf32>
    tpu.vector_store %arg14[%c0_42, %c0_43], %76 {strides = array<i32>} : memref<2x32xf32, #tpu.memory_space<vmem>>, vector<2x32xf32>,
    %c0_44 = arith.constant 0 : index
    %c0_45 = arith.constant 0 : index
    %86 = vector.load %arg15[%c0_44, %c0_45] : memref<2x32xf32, #tpu.memory_space<vmem>>, vector<2x32xf32>
    tpu.vector_store %arg15[%c0_44, %c0_45], %74 {strides = array<i32>} : memref<2x32xf32, #tpu.memory_space<vmem>>, vector<2x32xf32>,
    return
  }
}

</mosaic_0001>

<llo_original>
// kernel: tpu_custom_call.1
$region0: #{tpu_custom_call.1}
  #allocation0 [shape = 'u32[]', space=smem, size = 0x4, offset = 0x4, fixed_abs, tag = 'smem constant byte address 0x4 - core index']
  #allocation1 [shape = 'u32[144,128]{1,0:T(1,128)}', space=vmem, size = 0x12000, scoped, tag = 'internal scratch']
  %s0 = inlined_call_operand.vmem [shape: bf16[2,16], index: 0, kind: input, shape index: {}]
  %s1 = inlined_call_operand.vmem [shape: f32[2,32], index: 1, kind: input, shape index: {}]
  %s2 = inlined_call_operand.vmem [shape: f32[2,32], index: 2, kind: input, shape index: {}]
  %s3 = inlined_call_operand.hbm [shape: f32[2,8,64], index: 3, kind: input, shape index: {}]
  %s4 = inlined_call_operand.vmem [shape: f32[2,8], index: 4, kind: input, shape index: {}]
  %s5 = inlined_call_operand.hbm [shape: bf16[32,32], index: 5, kind: input, shape index: {}]
  %s6 = inlined_call_operand.vmem [shape: bf16[64,32], index: 6, kind: input, shape index: {}]
  %s7 = inlined_call_operand.vmem [shape: f32[1,32], index: 7, kind: input, shape index: {}]
  %s8 = inlined_call_operand.hbm [shape: f32[1,32], index: 8, kind: input, shape index: {}]
  %s9 = inlined_call_operand.vmem [shape: bf16[112,128], index: 9, kind: input, shape index: {}]
  %s10 = inlined_call_operand.vmem [shape: f32[1,128], index: 10, kind: input, shape index: {}]
  %s11 = inlined_call_operand.hbm [shape: bf16[112,128], index: 11, kind: input, shape index: {}]
  %s12 = inlined_call_operand.vmem [shape: f32[1,128], index: 12, kind: input, shape index: {}]
  %s13 = inlined_call_operand.hbm [shape: f32[2,128], index: 13, kind: output, shape index: {0}]
  %s14 = inlined_call_operand.hbm [shape: f32[2,32], index: 14, kind: output, shape index: {1}]
  %s15 = inlined_call_operand.hbm [shape: f32[2,32], index: 15, kind: output, shape index: {2}]
  %s16 = inlined_call_operand.hbm [shape: f32[2,8], index: 16, kind: output, shape index: {3}]
  %17 = xla_tuple %s13, %s14, %s15, %s16
  %s18 = sld [smem:[#allocation0]]
  $region102: #{tpu_custom_call.1} parent=0
    _
  %s20 = ssub.s32 1, %s18
  %s21 = scalar_select 0, %s20, %s18
  $region1: #{tpu_custom_call.1} parent=0
    #allocation2 [shape = 'u8[8192]{0}', space=vmem, size = 0x2000, scoped, tag = 'input window, operand 3, single buffered']
    #allocation3 [shape = 's32[1]{0}', space=sflag, size = 0x4, scoped, tag = 'scoped memory for tpu_custom_call.1']
    #allocation4 [shape = 's32[1]{0}', space=sflag, size = 0x4, scoped, tag = 'scoped memory for tpu_custom_call.1']
    #allocation5 [shape = 'u8[8192]{0}', space=vmem, size = 0x2000, scoped, tag = 'input window, operand 5, single buffered']
    #allocation6 [shape = 's32[1]{0}', space=sflag, size = 0x4, scoped, tag = 'scoped memory for tpu_custom_call.1']
    #allocation7 [shape = 'u8[512]{0}', space=vmem, size = 0x400, scoped, tag = 'input window, operand 8, single buffered']
    #allocation8 [shape = 'u8[28672]{0}', space=vmem, size = 0x7000, scoped, tag = 'input window, operand 11, single buffered']
    #allocation9 [shape = 's32[1]{0}', space=sflag, size = 0x4, scoped, tag = 'scoped memory for tpu_custom_call.1']
    #allocation10 [shape = 'u8[1024]{0}', space=vmem, size = 0x400, scoped, tag = 'output window, operand 0, single buffered']
    #allocation11 [shape = 'u8[1024]{0}', space=vmem, size = 0x400, scoped, tag = 'output window, operand 1, single buffered']
    #allocation12 [shape = 's32[1]{0}', space=sflag, size = 0x4, scoped, tag = 'scoped memory for tpu_custom_call.1']
    #allocation13 [shape = 'u8[1024]{0}', space=vmem, size = 0x400, scoped, tag = 'output window, operand 2, single buffered']
    #allocation14 [shape = 'u8[1024]{0}', space=vmem, size = 0x400, scoped, tag = 'output window, operand 3, single buffered']
    #allocation15 [shape = 's32[1]{0}', space=sflag, size = 0x4, scoped, tag = 'scoped memory for tpu_custom_call.1']
    %22 = vsyncpa [#allocation3], 0
    %23 = vsyncpa [#allocation6], 0
    %24 = vsyncpa [#allocation9], 0
    %25 = vsyncpa [#allocation4], 0
    %26 = vsyncpa [#allocation12], 0
    %27 = vsyncpa [#allocation15], 0
    // Predicated region
    $region2: #{tpu_custom_call.1} parent=1 // pred_check
      _
    $region3: #{tpu_custom_call.1} parent=1 // pred_check_branch
      %29 = sbr.rel (0) target = $region5
    $region4: #{tpu_custom_call.1} parent=1 // pred_region
      _
    $region5: #{tpu_custom_call.1} parent=1 // pred_fallthru
      _
    // Predicated region
    $region6: #{tpu_custom_call.1} parent=1 // pred_check
      _
    $region7: #{tpu_custom_call.1} parent=1 // pred_check_branch
      %31 = sbr.rel (0) target = $region9
    $region8: #{tpu_custom_call.1} parent=1 // pred_region
      _
    $region9: #{tpu_custom_call.1} parent=1 // pred_fallthru
      _
    // Predicated region
    $region10: #{tpu_custom_call.1} parent=1 // pred_check
      _
    $region11: #{tpu_custom_call.1} parent=1 // pred_check_branch
      %33 = sbr.rel (0) target = $region13
    $region12: #{tpu_custom_call.1} parent=1 // pred_region
      _
    $region13: #{tpu_custom_call.1} parent=1 // pred_fallthru
      _
    // Predicated region
    $region14: #{tpu_custom_call.1} parent=1 // pred_check
      _
    $region15: #{tpu_custom_call.1} parent=1 // pred_check_branch
      %35 = sbr.rel (0) target = $region17
    $region16: #{tpu_custom_call.1} parent=1 // pred_region
      %s37 = ssub.s32 256, 256
      %38 = vsyncadd [#allocation3], %s37
      %s39 = sshll.u32 [#allocation2], 4
      %s40 = int_to_ptr.vmem [resolvable:$true] %s39
      %45 = dma.hbm_to_vmem [thread:$0]  %s3, 256, %s40, [#allocation3], 128, 128, 8
    $region17: #{tpu_custom_call.1} parent=1 // pred_fallthru
      _
    // Predicated region
    $region18: #{tpu_custom_call.1} parent=1 // pred_check
      _
    $region19: #{tpu_custom_call.1} parent=1 // pred_check_branch
      %47 = sbr.rel (0) target = $region21
    $region20: #{tpu_custom_call.1} parent=1 // pred_region
      _
    $region21: #{tpu_custom_call.1} parent=1 // pred_fallthru
      _
    // Predicated region
    $region22: #{tpu_custom_call.1} parent=1 // pred_check
      _
    $region23: #{tpu_custom_call.1} parent=1 // pred_check_branch
      %49 = sbr.rel (0) target = $region25
    $region24: #{tpu_custom_call.1} parent=1 // pred_region
      %s51 = ssub.s32 256, 256
      %52 = vsyncadd [#allocation6], %s51
      %s53 = sshll.u32 [#allocation5], 4
      %s54 = int_to_ptr.vmem [resolvable:$true] %s53
      %59 = dma.hbm_to_vmem [thread:$0]  %s5, 256, %s54, [#allocation6], 64, 64, 4
    $region25: #{tpu_custom_call.1} parent=1 // pred_fallthru
      _
    // Predicated region
    $region26: #{tpu_custom_call.1} parent=1 // pred_check
      _
    $region27: #{tpu_custom_call.1} parent=1 // pred_check_branch
      %61 = sbr.rel (0) target = $region29
    $region28: #{tpu_custom_call.1} parent=1 // pred_region
      _
    $region29: #{tpu_custom_call.1} parent=1 // pred_fallthru
      _
    // Predicated region
    $region30: #{tpu_custom_call.1} parent=1 // pred_check
      _
    $region31: #{tpu_custom_call.1} parent=1 // pred_check_branch
      %63 = sbr.rel (0) target = $region33
    $region32: #{tpu_custom_call.1} parent=1 // pred_region
      _
    $region33: #{tpu_custom_call.1} parent=1 // pred_fallthru
      _
    // Predicated region
    $region34: #{tpu_custom_call.1} parent=1 // pred_check
      _
    $region35: #{tpu_custom_call.1} parent=1 // pred_check_branch
      %65 = sbr.rel (0) target = $region37
    $region36: #{tpu_custom_call.1} parent=1 // pred_region
      %s67 = ssub.s32 16, 16
      %68 = vsyncadd [#allocation6], %s67
      %s70 = sshll.u32 [#allocation7], 4
      %s71 = int_to_ptr.vmem [resolvable:$true] %s70
      %73 = dma.hbm_to_vmem [thread:$0]  %s8, 16, %s71, [#allocation6]
    $region37: #{tpu_custom_call.1} parent=1 // pred_fallthru
      _
    // Predicated region
    $region38: #{tpu_custom_call.1} parent=1 // pred_check
      _
    $region39: #{tpu_custom_call.1} parent=1 // pred_check_branch
      %75 = sbr.rel (0) target = $region41
    $region40: #{tpu_custom_call.1} parent=1 // pred_region
      _
    $region41: #{tpu_custom_call.1} parent=1 // pred_fallthru
      _
    // Predicated region
    $region42: #{tpu_custom_call.1} parent=1 // pred_check
      _
    $region43: #{tpu_custom_call.1} parent=1 // pred_check_branch
      %77 = sbr.rel (0) target = $region45
    $region44: #{tpu_custom_call.1} parent=1 // pred_region
      _
    $region45: #{tpu_custom_call.1} parent=1 // pred_fallthru
      _
    // Predicated region
    $region46: #{tpu_custom_call.1} parent=1 // pred_check
      _
    $region47: #{tpu_custom_call.1} parent=1 // pred_check_branch
      %79 = sbr.rel (0) target = $region49
    $region48: #{tpu_custom_call.1} parent=1 // pred_region
      %s81 = ssub.s32 896, 896
      %82 = vsyncadd [#allocation9], %s81
      %s83 = sshll.u32 [#allocation8], 4
      %s84 = int_to_ptr.vmem [resolvable:$true] %s83
      %89 = dma.hbm_to_vmem [thread:$0]  %s11, 896, %s84, [#allocation9], 64, 64, 4
    $region49: #{tpu_custom_call.1} parent=1 // pred_fallthru
      _
    // Predicated region
    $region50: #{tpu_custom_call.1} parent=1 // pred_check
      _
    $region51: #{tpu_custom_call.1} parent=1 // pred_check_branch
      %91 = sbr.rel (0) target = $region53
    $region52: #{tpu_custom_call.1} parent=1 // pred_region
      _
    $region53: #{tpu_custom_call.1} parent=1 // pred_fallthru
      _
    // Predicated region
    $region54: #{tpu_custom_call.1} parent=1 // pred_check
      _
    $region55: #{tpu_custom_call.1} parent=1 // pred_check_branch
      %93 = sbr.rel (0) target = $region57
    $region56: #{tpu_custom_call.1} parent=1 // pred_region
      %94 = dma.done [#allocation3], 256
    $region57: #{tpu_custom_call.1} parent=1 // pred_fallthru
      _
    // Predicated region
    $region58: #{tpu_custom_call.1} parent=1 // pred_check
      _
    $region59: #{tpu_custom_call.1} parent=1 // pred_check_branch
      %96 = sbr.rel (0) target = $region61
    $region60: #{tpu_custom_call.1} parent=1 // pred_region
      %97 = dma.done [#allocation6], 256
    $region61: #{tpu_custom_call.1} parent=1 // pred_fallthru
      _
    // Predicated region
    $region62: #{tpu_custom_call.1} parent=1 // pred_check
      _
    $region63: #{tpu_custom_call.1} parent=1 // pred_check_branch
      %99 = sbr.rel (0) target = $region65
    $region64: #{tpu_custom_call.1} parent=1 // pred_region
      %100 = dma.done [#allocation6], 16
    $region65: #{tpu_custom_call.1} parent=1 // pred_fallthru
      _
    // Predicated region
    $region66: #{tpu_custom_call.1} parent=1 // pred_check
      _
    $region67: #{tpu_custom_call.1} parent=1 // pred_check_branch
      %102 = sbr.rel (0) target = $region69
    $region68: #{tpu_custom_call.1} parent=1 // pred_region
      %103 = dma.done [#allocation9], 896
    $region69: #{tpu_custom_call.1} parent=1 // pred_fallthru
      _
    %v105 = vld [vmem:[%s0] sm:$0x1]
    %v106 = vld [vmem:[%s1] sm:$0x3]
    %v107 = vpack.c.bf16 %v106, %v106
    %v108 = vld [vmem:[%s2] sm:$0x3]
    %v109 = vld [vmem:[#allocation2] sm:$0xff]
    %v110 = vld [vmem:[#allocation2 + $0x8] sm:$0xff]
    %v111 = vld [vmem:[%s4] sm:$0x3]
    %v112 = vld [vmem:[#allocation5] sm:$0xf]
    %v113 = vld [vmem:[#allocation5 + $0x4] sm:$0xf]
    %v114 = vld [vmem:[#allocation5 + $0x8] sm:$0xf]
    %v115 = vld [vmem:[#allocation5 + $0xc] sm:$0xf]
    %v116 = vld [vmem:[%s7] sm:$0x1]
    %v118 = vlaneseq
    %v119 = vshrl.u32 %v118, 7
    %v120 = vsub.s32 0, %v119
    %v121 = vrot.slane %v116, %v120
    %v127 = vunpack.c.l.b16 %v112
    %v128 = vunpack.c.l.b16 %v113
    %v129 = vunpack.c.l.b16 %v114
    %v130 = vunpack.c.l.b16 %v115
    %v131 = vpack.c.b16 %v128, %v127
    %v132 = vpack.c.b16 %v130, %v129
    %vm135 = vcmask 261120
    %v137 = vsel %vm135, %v107, 0
    %139 = vmatprep.subr.bf16.mxu0 0
    %140 = vmatpush1.bf16.msra.mxu0 0
    %141 = vmatprep.subr.bf16.mxu0 0
    %142 = vmatpush1.bf16.msra.mxu0 0
    %143 = vmatprep.subr.bf16.mxu0 0
    %144 = vmatpush1.bf16.msra.mxu0 0
    %145 = vmatprep.subr.bf16.mxu0 0
    %146 = vmatpush1.bf16.msra.mxu0 0
    %147 = vmatprep.subr.bf16.mxu0 0
    %148 = vmatpush1.bf16.msra.mxu0 0
    %149 = vmatprep.subr.bf16.mxu0 0
    %150 = vmatpush1.bf16.msra.mxu0 0
    %151 = vmatprep.subr.bf16.mxu0 0
    %152 = vmatpush1.bf16.msra.mxu0 %v132
    %153 = vmatprep.subr.bf16.mxu0 0
    %154 = vmatpush1.bf16.msra.mxu0 %v131
    %155 = vmatprep.subr.bf16.mxu0 0
    %156 = vmatpush2.bf16.msra.mxu0 0
    %157 = vmatprep.subr.bf16.mxu0 0
    %158 = vmatpush2.bf16.msra.mxu0 0
    %159 = vmatprep.subr.bf16.mxu0 0
    %160 = vmatpush2.bf16.msra.mxu0 0
    %161 = vmatprep.subr.bf16.mxu0 0
    %162 = vmatpush2.bf16.msra.mxu0 0
    %163 = vmatprep.subr.bf16.mxu0 0
    %164 = vmatpush2.bf16.msra.mxu0 0
    %165 = vmatprep.subr.bf16.mxu0 0
    %166 = vmatpush2.bf16.msra.mxu0 0
    %167 = vmatprep.subr.bf16.mxu0 0
    %168 = vmatpush2.bf16.msra.mxu0 0
    %169 = vmatprep.subr.bf16.mxu0 0
    %170 = vmatpush2.bf16.msra.mxu0 0
    %171 = vmatprep.mubr.bf16.mxu0 0
    %172 = vmatmul.mubr.bf16.gmra.mxu0 %v137
    %v173 = vpop.f32.mrf.mxu0
    %v174 = vadd.f32 %v121, %v173
    %v175 = vpop.f32.mrf.mxu0
    %v176 = vpop.f32.mrf.mxu0
    %v177 = vpop.f32.mrf.mxu0
    %178 = vdwg.mxu0
    %v179 = vpack.c.bf16 %v110, %v109
    %v180 = vld [vmem:[%s6] sm:$0xf]
    %v181 = vld [vmem:[%s6 + $0x4] sm:$0xf]
    %v182 = vld [vmem:[%s6 + $0x8] sm:$0xf]
    %v183 = vld [vmem:[%s6 + $0xc] sm:$0xf]
    %v184 = vld [vmem:[%s6 + $0x10] sm:$0xf]
    %v185 = vld [vmem:[%s6 + $0x14] sm:$0xf]
    %v186 = vld [vmem:[%s6 + $0x18] sm:$0xf]
    %v187 = vld [vmem:[%s6 + $0x1c] sm:$0xf]
    %v196 = vunpack.c.l.b16 %v180
    %v197 = vunpack.c.l.b16 %v181
    %v198 = vunpack.c.l.b16 %v182
    %v199 = vunpack.c.l.b16 %v183
    %v200 = vunpack.c.l.b16 %v184
    %v201 = vunpack.c.l.b16 %v185
    %v202 = vunpack.c.l.b16 %v186
    %v203 = vunpack.c.l.b16 %v187
    %v204 = vpack.c.b16 %v197, %v196
    %v205 = vpack.c.b16 %v199, %v198
    %v206 = vpack.c.b16 %v201, %v200
    %v207 = vpack.c.b16 %v203, %v202
    %vm212 = vcmask 523264
    %v214 = vsel %vm212, %v179, 0
    %216 = vmatprep.subr.bf16.mxu0 0
    %217 = vmatpush1.bf16.msra.mxu0 0
    %218 = vmatprep.subr.bf16.mxu0 0
    %219 = vmatpush1.bf16.msra.mxu0 0
    %220 = vmatprep.subr.bf16.mxu0 0
    %221 = vmatpush1.bf16.msra.mxu0 0
    %222 = vmatprep.subr.bf16.mxu0 0
    %223 = vmatpush1.bf16.msra.mxu0 0
    %224 = vmatprep.subr.bf16.mxu0 0
    %225 = vmatpush1.bf16.msra.mxu0 %v207
    %226 = vmatprep.subr.bf16.mxu0 0
    %227 = vmatpush1.bf16.msra.mxu0 %v206
    %228 = vmatprep.subr.bf16.mxu0 0
    %229 = vmatpush1.bf16.msra.mxu0 %v205
    %230 = vmatprep.subr.bf16.mxu0 0
    %231 = vmatpush1.bf16.msra.mxu0 %v204
    %232 = vmatprep.subr.bf16.mxu0 0
    %233 = vmatpush2.bf16.msra.mxu0 0
    %234 = vmatprep.subr.bf16.mxu0 0
    %235 = vmatpush2.bf16.msra.mxu0 0
    %236 = vmatprep.subr.bf16.mxu0 0
    %237 = vmatpush2.bf16.msra.mxu0 0
    %238 = vmatprep.subr.bf16.mxu0 0
    %239 = vmatpush2.bf16.msra.mxu0 0
    %240 = vmatprep.subr.bf16.mxu0 0
    %241 = vmatpush2.bf16.msra.mxu0 0
    %242 = vmatprep.subr.bf16.mxu0 0
    %243 = vmatpush2.bf16.msra.mxu0 0
    %244 = vmatprep.subr.bf16.mxu0 0
    %245 = vmatpush2.bf16.msra.mxu0 0
    %246 = vmatprep.subr.bf16.mxu0 0
    %247 = vmatpush2.bf16.msra.mxu0 0
    %248 = vmatprep.mubr.bf16.mxu0 0
    %249 = vmatmul.mubr.bf16.gmra.mxu0 %v214
    %v250 = vpop.f32.mrf.mxu0
    %v251 = vadd.f32 0.0, %v250
    %v252 = vpop.f32.mrf.mxu0
    %v253 = vpop.f32.mrf.mxu0
    %v254 = vadd.f32 0.0, %v253
    %v255 = vpop.f32.mrf.mxu0
    %256 = vdwg.mxu0
    %v259 = vunpack.c.l.s4 1966171168
    %v260 = vunpack.c.0.s8 %v259
    %v261 = vlaneseq
    %v262 = vshrl.u32 %v261, 7
    %v263 = vsub.s32 %v260, %v262
    %v264 = vrot.slane %v174, %v263
    %v265 = vcombine.high %v264, %v264
    %v267 = vunpack.c.l.s4 1966171168
    %v268 = vunpack.c.0.s8 %v267
    %v269 = vlaneseq
    %v270 = vshrl.u32 %v269, 7
    %v271 = vsub.s32 %v268, %v270
    %v272 = vrot.slane %v264, %v271
    %v274 = vunpack.c.l.s4 1966171168
    %v275 = vunpack.c.0.s8 %v274
    %v276 = vlaneseq
    %v277 = vshrl.u32 %v276, 7
    %v278 = vsub.s32 %v275, %v277
    %v279 = vrot.slane %v265, %v278
    %v280 = vlaneseq
    %v281 = vshrl.u32 %v280, 7
    %v282 = vsub.s32 0, %v281
    %v283 = vrot.slane %v272, %v282
    %v284 = vlaneseq
    %v285 = vshrl.u32 %v284, 7
    %v286 = vsub.s32 0, %v285
    %v287 = vrot.slane %v279, %v286
    %v290 = vadd.f32 %v251, %v283
    %v291 = vadd.f32 %v254, %v287
    %v292 = vtanh.pop %v290
    %v293 = vtanh.pop %v291
    %v294 = vld [vmem:[#allocation7] sm:$0x1]
    %v296 = vlaneseq
    %v297 = vshrl.u32 %v296, 7
    %v298 = vsub.s32 0, %v297
    %v299 = vrot.slane %v294, %v298
    %v301 = vmul.f32 %v292, %v299
    %v302 = vmul.f32 %v293, %v299
    %v303 = vsel %vm135, %v301, 0.0
    %304 = vadd.xlane.f32.xlu0 %v303
    %v305 = vpop.xlane.xlu0 %304
    %v306 = vsel %vm135, %v302, 0.0
    %307 = vadd.xlane.f32.xlu0 %v306
    %v308 = vpop.xlane.xlu0 %307
    %vm309 = vcmp.eq.f32.partialorder %v111, 0.0
    %v312 = vlaneseq
    %v313 = vand.u32 %v312, 127
    %v314 = vlaneseq
    %v315 = vshrl.u32 %v314, 7
    %v316 = vsub.s32 %v313, %v315
    %v317 = vrot.slane %v305, %v316
    %v318 = vlaneseq
    %v319 = vshrl.u32 %v318, 7
    %v320 = vsub.s32 %v313, %v319
    %v321 = vrot.slane %v308, %v320
    %vm322 = vcmask 1041409
    %v323 = vsel %vm322, %v321, %v317
    %v325 = vsel %vm309, -1e+10, %v323
    %vm326 = vcmask 58368
    %v327 = vsel %vm326, %v325, -inf
    %328 = vmax.xlane.f32.xlu0 %v327
    %v329 = vpop.xlane.xlu0 %328
    %v330 = vsub.f32 %v325, %v329
    %v331 = vmul.f32 %v330, 1.442695
    %v332 = vpow.pop %v331
    %v333 = vsel %vm326, %v332, 0.0
    %334 = vadd.xlane.f32.xlu0 %v333
    %v335 = vpop.xlane.xlu0 %334
    %v336 = vrcp.pop %v335
    %v337 = vmul.f32 %v332, %v336
    %338 = vst.msk [vmem:[#allocation14] sm:$0x3] %vm326, %v337
    %v339 = vlaneseq
    %v340 = vshrl.u32 %v339, 7
    %v341 = vsub.s32 0, %v340
    %v342 = vrot.slane %v337, %v341
    %344 = vbcast.lane.b32.xlu0 %v342, 256
    %v345 = vpop.permute.xlu0 %344
    %v346 = vlaneseq
    %v347 = vshrl.u32 %v346, 7
    %v348 = vsub.s32 1, %v347
    %v349 = vrot.slane %v337, %v348
    %351 = vbcast.lane.b32.xlu0 %v349, 256
    %v352 = vpop.permute.xlu0 %351
    %v353 = vmul.f32 %v345, %v109
    %v354 = vmul.f32 %v352, %v110
    %v355 = vsel %vm212, %v353, 0.0
    %v356 = vrot.slane %v355, 4
    %v357 = vadd.f32 %v355, %v356
    %v358 = vrot.slane %v357, 2
    %v359 = vadd.f32 %v357, %v358
    %v360 = vrot.slane %v359, 1
    %v361 = vadd.f32 %v359, %v360
    %v362 = vsel %vm212, %v354, 0.0
    %v363 = vrot.slane %v362, 4
    %v364 = vadd.f32 %v362, %v363
    %v365 = vrot.slane %v364, 2
    %v366 = vadd.f32 %v364, %v365
    %v367 = vrot.slane %v366, 1
    %v368 = vadd.f32 %v366, %v367
    %v369 = vpack.c.bf16 %v361, %v361
    %v370 = vpack.c.bf16 %v368, %v368
    %v373 = vunpack.c.l.b16 %v369
    %v374 = vunpack.c.l.b16 %v370
    %v375 = vsel %vm322, %v374, %v373
    %v376 = vpack.c.b16 %v375, %v375
    %v379 = vunpack.c.l.s4 1966171168
    %v380 = vunpack.c.0.s8 %v379
    %v381 = vlaneseq
    %v382 = vshrl.u32 %v381, 7
    %v383 = vsub.s32 %v380, %v382
    %v384 = vrot.slane %v105, %v383
    %v386 = vunpack.c.l.s4 1966171168
    %v387 = vunpack.c.0.s8 %v386
    %v388 = vlaneseq
    %v389 = vshrl.u32 %v388, 7
    %v390 = vsub.s32 %v387, %v389
    %v391 = vrot.slane %v384, %v390
    %392 = vrot.lane.b32.xlu0 %v391, 64
    %v393 = vpop.permute.xlu0 %392
    %v396 = vsel %vm212, %v376, %v393
    %398 = vrot.lane.b32.xlu0 %v107, 80
    %v399 = vpop.permute.xlu0 %398
    %vm400 = vcmask 654336
    %v402 = vsel %vm400, %v396, %v399
    %v403 = vld [vmem:[%s9] sm:$0xf]
    %v404 = vld [vmem:[%s9 + $0x4] sm:$0xf]
    %v405 = vld [vmem:[%s9 + $0x8] sm:$0xf]
    %v406 = vld [vmem:[%s9 + $0xc] sm:$0xf]
    %v407 = vld [vmem:[%s9 + $0x10] sm:$0xf]
    %v408 = vld [vmem:[%s9 + $0x14] sm:$0xf]
    %v409 = vld [vmem:[%s9 + $0x18] sm:$0xf]
    %v410 = vld [vmem:[%s9 + $0x1c] sm:$0xf]
    %v411 = vld [vmem:[%s9 + $0x20] sm:$0xf]
    %v412 = vld [vmem:[%s9 + $0x24] sm:$0xf]
    %v413 = vld [vmem:[%s9 + $0x28] sm:$0xf]
    %v414 = vld [vmem:[%s9 + $0x2c] sm:$0xf]
    %v415 = vld [vmem:[%s9 + $0x30] sm:$0xf]
    %v416 = vld [vmem:[%s9 + $0x34] sm:$0xf]
    %v417 = vld [vmem:[%s10] sm:$0x1]
    %v419 = vlaneseq
    %v420 = vshrl.u32 %v419, 7
    %v421 = vsub.s32 0, %v420
    %v422 = vrot.slane %v417, %v421
    %v438 = vunpack.c.l.b16 %v403
    %v439 = vunpack.c.l.b16 %v404
    %v440 = vunpack.c.l.b16 %v405
    %v441 = vunpack.c.l.b16 %v406
    %v442 = vunpack.c.l.b16 %v407
    %v443 = vunpack.c.l.b16 %v408
    %v444 = vunpack.c.l.b16 %v409
    %v445 = vunpack.c.l.b16 %v410
    %v446 = vunpack.c.l.b16 %v411
    %v447 = vunpack.c.l.b16 %v412
    %v448 = vunpack.c.l.b16 %v413
    %v449 = vunpack.c.l.b16 %v414
    %v450 = vunpack.c.l.b16 %v415
    %v451 = vunpack.c.l.b16 %v416
    %v452 = vpack.c.b16 %v439, %v438
    %v453 = vpack.c.b16 %v441, %v440
    %v454 = vpack.c.b16 %v443, %v442
    %v455 = vpack.c.b16 %v445, %v444
    %v456 = vpack.c.b16 %v447, %v446
    %v457 = vpack.c.b16 %v449, %v448
    %v458 = vpack.c.b16 %v451, %v450
    %vm466 = vcmask 916480
    %v467 = vsel %vm466, %v402, 0
    %469 = vmatprep.subr.bf16.mxu0 0
    %470 = vmatpush1.bf16.msra.mxu0 0
    %471 = vmatprep.subr.bf16.mxu0 0
    %472 = vmatpush1.bf16.msra.mxu0 %v458
    %473 = vmatprep.subr.bf16.mxu0 0
    %474 = vmatpush1.bf16.msra.mxu0 %v457
    %475 = vmatprep.subr.bf16.mxu0 0
    %476 = vmatpush1.bf16.msra.mxu0 %v456
    %477 = vmatprep.subr.bf16.mxu0 0
    %478 = vmatpush1.bf16.msra.mxu0 %v455
    %479 = vmatprep.subr.bf16.mxu0 0
    %480 = vmatpush1.bf16.msra.mxu0 %v454
    %481 = vmatprep.subr.bf16.mxu0 0
    %482 = vmatpush1.bf16.msra.mxu0 %v453
    %483 = vmatprep.subr.bf16.mxu0 0
    %484 = vmatpush1.bf16.msra.mxu0 %v452
    %485 = vmatprep.subr.bf16.mxu0 0
    %486 = vmatpush2.bf16.msra.mxu0 0
    %487 = vmatprep.subr.bf16.mxu0 0
    %488 = vmatpush2.bf16.msra.mxu0 0
    %489 = vmatprep.subr.bf16.mxu0 0
    %490 = vmatpush2.bf16.msra.mxu0 0
    %491 = vmatprep.subr.bf16.mxu0 0
    %492 = vmatpush2.bf16.msra.mxu0 0
    %493 = vmatprep.subr.bf16.mxu0 0
    %494 = vmatpush2.bf16.msra.mxu0 0
    %495 = vmatprep.subr.bf16.mxu0 0
    %496 = vmatpush2.bf16.msra.mxu0 0
    %497 = vmatprep.subr.bf16.mxu0 0
    %498 = vmatpush2.bf16.msra.mxu0 0
    %499 = vmatprep.subr.bf16.mxu0 0
    %500 = vmatpush2.bf16.msra.mxu0 0
    %501 = vmatprep.mubr.bf16.mxu0 0
    %502 = vmatmul.mubr.bf16.gmra.mxu0 %v467
    %v503 = vpop.f32.mrf.mxu0
    %v504 = vadd.f32 %v422, %v503
    %v505 = vpop.f32.mrf.mxu0
    %v506 = vpop.f32.mrf.mxu0
    %v507 = vpop.f32.mrf.mxu0
    %508 = vdwg.mxu0
    %v509 = vxor.u32 %v504, 2147483648
    %v510 = vmul.f32 %v509, 1.442695
    %v511 = vpow.pop %v510
    %v512 = vadd.f32 %v511, 1.0
    %v513 = vrcp.pop %v512
    %v514 = vmul.f32 1.0, %v513
    %v515 = vtanh.pop %v504
    %517 = vrot.lane.b32.xlu0 %v108, 32
    %v518 = vpop.permute.xlu0 %517
    %v520 = vmul.f32 %v514, %v518
    %522 = vrot.lane.b32.xlu0 %v515, 64
    %v523 = vpop.permute.xlu0 %522
    %v525 = vmul.f32 %v514, %v523
    %527 = vrot.lane.b32.xlu0 %v525, 32
    %v528 = vpop.permute.xlu0 %527
    %v530 = vadd.f32 %v520, %v528
    %v531 = vtanh.pop %v530
    %533 = vrot.lane.b32.xlu0 %v531, 64
    %v534 = vpop.permute.xlu0 %533
    %v536 = vmul.f32 %v514, %v534
    %v537 = vpack.c.bf16 %v536, %v536
    %539 = vrot.lane.b32.xlu0 %v537, 32
    %v540 = vpop.permute.xlu0 %539
    %542 = vrot.lane.b32.xlu0 %v396, 32
    %v543 = vpop.permute.xlu0 %542
    %v546 = vsel %vm135, %v540, %v543
    %v547 = vld [vmem:[#allocation8] sm:$0xf]
    %v548 = vld [vmem:[#allocation8 + $0x4] sm:$0xf]
    %v549 = vld [vmem:[#allocation8 + $0x8] sm:$0xf]
    %v550 = vld [vmem:[#allocation8 + $0xc] sm:$0xf]
    %v551 = vld [vmem:[#allocation8 + $0x10] sm:$0xf]
    %v552 = vld [vmem:[#allocation8 + $0x14] sm:$0xf]
    %v553 = vld [vmem:[#allocation8 + $0x18] sm:$0xf]
    %v554 = vld [vmem:[#allocation8 + $0x1c] sm:$0xf]
    %v555 = vld [vmem:[#allocation8 + $0x20] sm:$0xf]
    %v556 = vld [vmem:[#allocation8 + $0x24] sm:$0xf]
    %v557 = vld [vmem:[#allocation8 + $0x28] sm:$0xf]
    %v558 = vld [vmem:[#allocation8 + $0x2c] sm:$0xf]
    %v559 = vld [vmem:[#allocation8 + $0x30] sm:$0xf]
    %v560 = vld [vmem:[#allocation8 + $0x34] sm:$0xf]
    %v561 = vld [vmem:[%s12] sm:$0x1]
    %v563 = vlaneseq
    %v564 = vshrl.u32 %v563, 7
    %v565 = vsub.s32 0, %v564
    %v566 = vrot.slane %v561, %v565
    %v582 = vunpack.c.l.b16 %v547
    %v583 = vunpack.c.l.b16 %v548
    %v584 = vunpack.c.l.b16 %v549
    %v585 = vunpack.c.l.b16 %v550
    %v586 = vunpack.c.l.b16 %v551
    %v587 = vunpack.c.l.b16 %v552
    %v588 = vunpack.c.l.b16 %v553
    %v589 = vunpack.c.l.b16 %v554
    %v590 = vunpack.c.l.b16 %v555
    %v591 = vunpack.c.l.b16 %v556
    %v592 = vunpack.c.l.b16 %v557
    %v593 = vunpack.c.l.b16 %v558
    %v594 = vunpack.c.l.b16 %v559
    %v595 = vunpack.c.l.b16 %v560
    %v596 = vpack.c.b16 %v583, %v582
    %v597 = vpack.c.b16 %v585, %v584
    %v598 = vpack.c.b16 %v587, %v586
    %v599 = vpack.c.b16 %v589, %v588
    %v600 = vpack.c.b16 %v591, %v590
    %v601 = vpack.c.b16 %v593, %v592
    %v602 = vpack.c.b16 %v595, %v594
    %v610 = vsel %vm466, %v546, 0
    %612 = vmatprep.subr.bf16.mxu0 0
    %613 = vmatpush1.bf16.msra.mxu0 0
    %614 = vmatprep.subr.bf16.mxu0 0
    %615 = vmatpush1.bf16.msra.mxu0 %v602
    %616 = vmatprep.subr.bf16.mxu0 0
    %617 = vmatpush1.bf16.msra.mxu0 %v601
    %618 = vmatprep.subr.bf16.mxu0 0
    %619 = vmatpush1.bf16.msra.mxu0 %v600
    %620 = vmatprep.subr.bf16.mxu0 0
    %621 = vmatpush1.bf16.msra.mxu0 %v599
    %622 = vmatprep.subr.bf16.mxu0 0
    %623 = vmatpush1.bf16.msra.mxu0 %v598
    %624 = vmatprep.subr.bf16.mxu0 0
    %625 = vmatpush1.bf16.msra.mxu0 %v597
    %626 = vmatprep.subr.bf16.mxu0 0
    %627 = vmatpush1.bf16.msra.mxu0 %v596
    %628 = vmatprep.subr.bf16.mxu0 0
    %629 = vmatpush2.bf16.msra.mxu0 0
    %630 = vmatprep.subr.bf16.mxu0 0
    %631 = vmatpush2.bf16.msra.mxu0 0
    %632 = vmatprep.subr.bf16.mxu0 0
    %633 = vmatpush2.bf16.msra.mxu0 0
    %634 = vmatprep.subr.bf16.mxu0 0
    %635 = vmatpush2.bf16.msra.mxu0 0
    %636 = vmatprep.subr.bf16.mxu0 0
    %637 = vmatpush2.bf16.msra.mxu0 0
    %638 = vmatprep.subr.bf16.mxu0 0
    %639 = vmatpush2.bf16.msra.mxu0 0
    %640 = vmatprep.subr.bf16.mxu0 0
    %641 = vmatpush2.bf16.msra.mxu0 0
    %642 = vmatprep.subr.bf16.mxu0 0
    %643 = vmatpush2.bf16.msra.mxu0 0
    %644 = vmatprep.mubr.bf16.mxu0 0
    %645 = vmatmul.mubr.bf16.gmra.mxu0 %v610
    %v646 = vpop.f32.mrf.mxu0
    %v647 = vadd.f32 %v566, %v646
    %v648 = vpop.f32.mrf.mxu0
    %v649 = vpop.f32.mrf.mxu0
    %v650 = vpop.f32.mrf.mxu0
    %651 = vdwg.mxu0
    %652 = vst [vmem:[#allocation10] sm:$0x3] %v647
    %654 = vrot.lane.b32.xlu0 %v536, 32
    %v655 = vpop.permute.xlu0 %654
    %vm657 = vcmask 254976
    %658 = vst.msk [vmem:[#allocation11] sm:$0x3] %vm657, %v655
    %660 = vrot.lane.b32.xlu0 %v530, 96
    %v661 = vpop.permute.xlu0 %660
    %663 = vst.msk [vmem:[#allocation13] sm:$0x3] %vm657, %v661
    // Predicated region
    $region70: #{tpu_custom_call.1} parent=1 // pred_check
      _
    $region71: #{tpu_custom_call.1} parent=1 // pred_check_branch
      %665 = sbr.rel (0) target = $region73
    $region72: #{tpu_custom_call.1} parent=1 // pred_region
      %s667 = ssub.s32 32, 32
      %668 = vsyncadd [#allocation4], %s667
      %s670 = sshll.u32 [#allocation10], 4
      %s671 = int_to_ptr.vmem [resolvable:$true] %s670
      %673 = dma.vmem_to_hbm [thread:$0]  %s671, 32, %s13, [#allocation4]
    $region73: #{tpu_custom_call.1} parent=1 // pred_fallthru
      _
    // Predicated region
    $region74: #{tpu_custom_call.1} parent=1 // pred_check
      _
    $region75: #{tpu_custom_call.1} parent=1 // pred_check_branch
      %675 = sbr.rel (0) target = $region77
    $region76: #{tpu_custom_call.1} parent=1 // pred_region
      %s677 = ssub.s32 32, 32
      %678 = vsyncadd [#allocation12], %s677
      %s680 = sshll.u32 [#allocation11], 4
      %s681 = int_to_ptr.vmem [resolvable:$true] %s680
      %683 = dma.vmem_to_hbm [thread:$0]  %s681, 32, %s14, [#allocation12]
    $region77: #{tpu_custom_call.1} parent=1 // pred_fallthru
      _
    // Predicated region
    $region78: #{tpu_custom_call.1} parent=1 // pred_check
      _
    $region79: #{tpu_custom_call.1} parent=1 // pred_check_branch
      %685 = sbr.rel (0) target = $region81
    $region80: #{tpu_custom_call.1} parent=1 // pred_region
      %s687 = ssub.s32 32, 32
      %688 = vsyncadd [#allocation12], %s687
      %s690 = sshll.u32 [#allocation13], 4
      %s691 = int_to_ptr.vmem [resolvable:$true] %s690
      %693 = dma.vmem_to_hbm [thread:$0]  %s691, 32, %s15, [#allocation12]
    $region81: #{tpu_custom_call.1} parent=1 // pred_fallthru
      _
    // Predicated region
    $region82: #{tpu_custom_call.1} parent=1 // pred_check
      _
    $region83: #{tpu_custom_call.1} parent=1 // pred_check_branch
      %695 = sbr.rel (0) target = $region85
    $region84: #{tpu_custom_call.1} parent=1 // pred_region
      %s697 = ssub.s32 32, 32
      %698 = vsyncadd [#allocation15], %s697
      %s700 = sshll.u32 [#allocation14], 4
      %s701 = int_to_ptr.vmem [resolvable:$true] %s700
      %703 = dma.vmem_to_hbm [thread:$0]  %s701, 32, %s16, [#allocation15]
    $region85: #{tpu_custom_call.1} parent=1 // pred_fallthru
      _
    // Predicated region
    $region86: #{tpu_custom_call.1} parent=1 // pred_check
      _
    $region87: #{tpu_custom_call.1} parent=1 // pred_check_branch
      %705 = sbr.rel (0) target = $region89
    $region88: #{tpu_custom_call.1} parent=1 // pred_region
      %706 = dma.done [#allocation4], 32
    $region89: #{tpu_custom_call.1} parent=1 // pred_fallthru
      _
    // Predicated region
    $region90: #{tpu_custom_call.1} parent=1 // pred_check
      _
    $region91: #{tpu_custom_call.1} parent=1 // pred_check_branch
      %708 = sbr.rel (0) target = $region93
    $region92: #{tpu_custom_call.1} parent=1 // pred_region
      %709 = dma.done [#allocation12], 32
    $region93: #{tpu_custom_call.1} parent=1 // pred_fallthru
      _
    // Predicated region
    $region94: #{tpu_custom_call.1} parent=1 // pred_check
      _
    $region95: #{tpu_custom_call.1} parent=1 // pred_check_branch
      %711 = sbr.rel (0) target = $region97
    $region96: #{tpu_custom_call.1} parent=1 // pred_region
      %712 = dma.done [#allocation12], 32
    $region97: #{tpu_custom_call.1} parent=1 // pred_fallthru
      _
    // Predicated region
    $region98: #{tpu_custom_call.1} parent=1 // pred_check
      _
    $region99: #{tpu_custom_call.1} parent=1 // pred_check_branch
      %714 = sbr.rel (0) target = $region101
    $region100: #{tpu_custom_call.1} parent=1 // pred_region
      %715 = dma.done [#allocation15], 32
    $region101: #{tpu_custom_call.1} parent=1 // pred_fallthru
      _
    %716 = vsyncpa [#allocation3], 1
    %717 = vsyncpa [#allocation6], 1
    %718 = vsyncpa [#allocation9], 1
    %719 = vsyncpa [#allocation4], 1
    %720 = vsyncpa [#allocation12], 1
    %721 = vsyncpa [#allocation15], 1

</llo_original>
